<compile_context>
chip_gen: v7x
topology: tpu7x:2x2x1
jax: 0.10.0
libtpu: 0.0.40
codegen_flags: <defaults>
</compile_context>

<pallas_src>
import functools

import jax
import jax.numpy as jnp
from jax.experimental import pallas as pl
from jax.experimental.pallas import tpu as pltpu


def _round_up(x: int, m: int) -> int:
    return ((x + m - 1) // m) * m


def _vmem_capacity_bytes() -> int:
    try:
        info = pltpu.get_tpu_info()
        cap = int(getattr(info, "vmem_capacity_bytes", 0) or 0)
        if cap > 0:
            return cap
    except Exception:
        pass
    return 64 * 1024 * 1024  # conservative fallback (v7x per-TC VMEM)


def _choose_pack_factor(rows: int, t: int, width_cap: int = 1024) -> int:
    """Largest divisor k of `rows` with k*t <= width_cap, preferring k*t % 128 == 0."""
    best_k, best_key = 1, (t % 128 == 0, t)
    kmax = max(1, width_cap // t)
    for k in range(2, min(rows, kmax) + 1):
        if rows % k:
            continue
        w = k * t
        key = (w % 128 == 0, w)
        if key > best_key:
            best_k, best_key = k, key
    return best_k


def _choose_tile_rows(rows: int, width: int, itemsize: int, target_bytes: int) -> int:
    lanes = _round_up(width, 128)
    tile = max(8, target_bytes // (lanes * itemsize))
    tile = max(8, (tile // 8) * 8)            # sublane-aligned
    if tile >= rows:
        return rows                           # full dim (allowed even if not %8)
    # Prefer a nearby divisor of `rows`: eliminates the ragged last block entirely.
    for d in range(tile, max(8, tile // 2) - 1, -8):
        if rows % d == 0:
            return d
    return tile


def _quadratic_loss_kernel(x_ref, t_ref, o_ref, acc_ref, *,
                           scale, tile_rows, valid_rows, num_blocks,
                           blocks_per_split, ragged, t_dim):
    c = pl.program_id(0)                  # core split axis ("parallel")
    i = pl.program_id(1)                  # row-tile reduction axis ("arbitrary")
    blk = c * blocks_per_split + i        # global row-block index

    @pl.when(i == 0)
    def _init():
        acc_ref[...] = jnp.zeros_like(acc_ref)

    # Squared error in f32 (promotes bf16/etc. inputs before arithmetic).
    d = x_ref[...].astype(jnp.float32) - t_ref[...].astype(jnp.float32)
    d = d * d

    def _accumulate(v):
        rows, w = v.shape
        acc_rows = acc_ref.shape[0]
        if rows == acc_rows:
            acc_ref[...] += v
        elif rows % acc_rows == 0:
            # Tree of full-vreg VALU adds; no per-step XLU sublane reduce.
            acc_ref[...] += jnp.sum(v.reshape(rows // acc_rows, acc_rows, w), axis=0)
        else:
            # Tiny-problem fallback (block == full array, fewer rows than 8).
            acc_ref[0:1, :] += jnp.sum(v, axis=0, keepdims=True)

    # Unmasked accumulate for every full block.  Phantom blocks from rounding
    # the per-core split (blk >= num_blocks) are skipped entirely.
    last_full = num_blocks - 1 if ragged else num_blocks

    @pl.when(blk < last_full)
    def _full():
        _accumulate(d)

    if ragged:
        # Static branch: only emitted when the final block is partial, and the
        # iota/compare/select mask only runs on that single block.
        @pl.when(blk == num_blocks - 1)
        def _masked():
            row = jax.lax.broadcasted_iota(jnp.int32, d.shape, 0) + blk * tile_rows
            _accumulate(jnp.where(row < valid_rows, d, 0.0))

    @pl.when(i == blocks_per_split - 1)
    def _finalize():
        acc = acc_ref[...]
        # trapezoid(f, dx) per original row = dx * (sum(f) - 0.5*(f[0] + f[-1])).
        # With k original rows lane-packed per accumulator row, the endpoints are
        # the columns where (col % T) is 0 or T-1; mean over rows folded into
        # `scale` = dx / (B*C).
        col = jax.lax.broadcasted_iota(jnp.int32, acc.shape, 1)
        pos = col % t_dim
        w = jnp.where((pos == 0) | (pos == t_dim - 1), 0.5, 1.0)
        partial = jnp.sum(acc * w) * scale
        o_ref[...] = jnp.full(o_ref.shape, partial, dtype=jnp.float32)


def quadratic_loss(inputs: jax.Array, targets: jax.Array, *,
                   target_tile_bytes: int | None = None) -> jax.Array:
    """inputs, targets: (B, C, T). Returns a scalar float32 loss."""
    assert inputs.shape == targets.shape and inputs.ndim == 3
    B, C, T = inputs.shape
    assert T >= 2, "trapezoid integration needs at least 2 samples along dim=2"

    R = B * C
    itemsize = jnp.dtype(inputs.dtype).itemsize

    # Lane-pack small T so every vreg row carries useful lanes.
    k = _choose_pack_factor(R, T)
    W = k * T
    rows = R // k
    x2 = inputs.reshape(rows, W)
    t2 = targets.reshape(rows, W)

    lanes = _round_up(W, 128)
    cap = _vmem_capacity_bytes()
    if target_tile_bytes is None:
        # ~60% of VMEM for the pipeline: 2 inputs x 2 buffers x tile + 1 f32 temp.
        target_tile_bytes = min(int(cap * 0.6) // 5, 12 * 1024 * 1024)
    tile_rows = _choose_tile_rows(rows, W, itemsize, target_tile_bytes)

    num_blocks = int(pl.cdiv(rows, tile_rows))
    ragged = (rows % tile_rows) != 0

    n_split = 2                                  # both TensorCores on v7x; a trivial
    P = int(pl.cdiv(num_blocks, n_split))        # outer loop of 2 on v5e/v6e.

    dx = 1.0 / (T - 1)
    scale = dx / R

    # VMEM accounting (2 inputs x 2 buffers x tile + f32 temp + accumulator).
    tile_in_bytes = tile_rows * lanes * itemsize
    tile_f32_bytes = tile_rows * lanes * 4
    acc_bytes = 8 * lanes * 4
    need = 4 * tile_in_bytes + tile_f32_bytes + acc_bytes + (2 << 20)
    if need > int(cap * 0.9):
        # TODO(synk): tile the T axis with a second reduction grid dimension.
        raise NotImplementedError("T too large for a single-row-tile pipeline")
    vmem_limit = int(min(cap, max(need + (4 << 20), 32 << 20)))

    kernel = functools.partial(
        _quadratic_loss_kernel,
        scale=scale, tile_rows=tile_rows, valid_rows=rows, num_blocks=num_blocks,
        blocks_per_split=P, ragged=ragged, t_dim=T)

    last_blk = num_blocks - 1

    def in_map(c, i):
        # Clamp phantom blocks (from per-core rounding) onto the last real block;
        # the kernel skips their accumulation.
        return (jnp.minimum(c * P + i, last_blk), 0)

    out = pl.pallas_call(
        kernel,
        out_shape=jax.ShapeDtypeStruct((n_split, 8, 128), jnp.float32),
        grid_spec=pltpu.PrefetchScalarGridSpec(
            num_scalar_prefetch=0,
            grid=(n_split, P),
            in_specs=[
                pl.BlockSpec((tile_rows, W), in_map),
                pl.BlockSpec((tile_rows, W), in_map),
            ],
            out_specs=pl.BlockSpec((1, 8, 128), lambda c, i: (c, 0, 0)),
            scratch_shapes=[pltpu.VMEM((8, W), jnp.float32)],
        ),
        compiler_params=pltpu.CompilerParams(
            dimension_semantics=("parallel", "arbitrary"),
            vmem_limit_bytes=vmem_limit,
        ),
        cost_estimate=pl.CostEstimate(
            flops=3 * R * T,
            transcendentals=0,
            bytes_accessed=2 * R * T * itemsize + n_split * 8 * 128 * 4,
        ),
    )(x2, t2)

    # Sum the per-core lane-dense partials.
    return jnp.sum(out[:, 0, 0])


def quadratic_loss_ref(inputs, targets):
    """Pure-JAX reference matching torch.trapezoid(dx=1/(T-1), dim=2) + mean."""
    T = inputs.shape[2]
    dx = 1.0 / (T - 1)
    d = (inputs.astype(jnp.float32) - targets.astype(jnp.float32)) ** 2
    trap = dx * (jnp.sum(d, axis=2) - 0.5 * (d[:, :, 0] + d[:, :, -1]))
    return jnp.mean(trap)


if __name__ == "__main__":
    key = jax.random.PRNGKey(0)

    # (shape, forced tile bytes) — the extra configs exercise the multi-block,
    # ragged-last-block, lane-packing and dual-split code paths at tiny sizes.
    configs = [
        ((2, 4, 16), None),            # module-scale demo: k=8 lane packing, 1 block
        ((4, 144, 100), 64 * 1024),    # multi-step reduction, divisor-snapped tiles
        ((8, 72, 16), 16 * 1024),      # ragged (masked) last block, k=64 packing
        ((2, 3, 250), None),           # odd T, non-128-multiple packed width
    ]

    for idx, (shape, tile_bytes) in enumerate(configs):
        k1, k2 = jax.random.split(jax.random.fold_in(key, idx))
        x = jax.random.normal(k1, shape, dtype=jnp.float32)
        t = jax.random.normal(k2, shape, dtype=jnp.float32)

        got = jax.block_until_ready(
            quadratic_loss(x, t, target_tile_bytes=tile_bytes))
        ref = jax.block_until_ready(quadratic_loss_ref(x, t))
        assert jnp.allclose(got, ref, rtol=1e-5, atol=1e-6), (shape, got, ref)

    print("KERNEL_OK")
</pallas_src>

<mosaic_0001>
module attributes {stable_mosaic.version = 11 : i64} {
  func.func @_quadratic_loss_kernel(%arg0: i32, %arg1: i32, %arg2: memref<1x128xf32, #tpu.memory_space<vmem>>, %arg3: memref<1x128xf32, #tpu.memory_space<vmem>>, %arg4: memref<1x8x128xf32, #tpu.memory_space<vmem>>, %arg5: memref<8x128xf32, #tpu.memory_space<vmem>>) attributes {dimension_semantics = [#tpu.dimension_semantics<parallel>, #tpu.dimension_semantics<arbitrary>], iteration_bounds = array<i64: 2, 1>, scalar_prefetch = 0 : i64, scratch_operands = 1 : i64, tpu.core_type = #tpu.core_type<tc>, window_params = [{transform_indices = @transform_0, window_bounds = array<i64: 1, 128>}, {transform_indices = @transform_1, window_bounds = array<i64: 1, 128>}, {transform_indices = @transform_2, window_bounds = array<i64: 1, 8, 128>}]} {
    %c1_i32 = arith.constant 1 : i32
    %0 = arith.muli %arg0, %c1_i32 : i32
    %1 = arith.addi %0, %arg1 : i32
    %c0_i32 = arith.constant 0 : i32
    %2 = arith.cmpi eq, %arg1, %c0_i32 : i32
    %3 = arith.extui %2 : i1 to i32
    %c0_i32_0 = arith.constant 0 : i32
    %4 = arith.cmpi ne, %3, %c0_i32_0 : i32
    scf.if %4 {
      %cst = arith.constant 0.000000e+00 : f32
      %15 = vector.broadcast %cst : f32 to vector<8x128xf32>
      %c0_8 = arith.constant 0 : index
      %c0_9 = arith.constant 0 : index
      %16 = vector.load %arg5[%c0_8, %c0_9] : memref<8x128xf32, #tpu.memory_space<vmem>>, vector<8x128xf32>
      tpu.vector_store %arg5[%c0_8, %c0_9], %15 {strides = array<i32>} : memref<8x128xf32, #tpu.memory_space<vmem>>, vector<8x128xf32>,
    } else {
    }
    %c0 = arith.constant 0 : index
    %c0_1 = arith.constant 0 : index
    %5 = vector.load %arg2[%c0, %c0_1] : memref<1x128xf32, #tpu.memory_space<vmem>>, vector<1x128xf32>
    %c0_2 = arith.constant 0 : index
    %c0_3 = arith.constant 0 : index
    %6 = vector.load %arg3[%c0_2, %c0_3] : memref<1x128xf32, #tpu.memory_space<vmem>>, vector<1x128xf32>
    %7 = arith.subf %5, %6 : vector<1x128xf32>
    %8 = arith.mulf %7, %7 : vector<1x128xf32>
    %c1_i32_4 = arith.constant 1 : i32
    %9 = arith.cmpi slt, %1, %c1_i32_4 : i32
    %10 = arith.extui %9 : i1 to i32
    %c0_i32_5 = arith.constant 0 : i32
    %11 = arith.cmpi ne, %10, %c0_i32_5 : i32
    scf.if %11 {
      %c0_8 = arith.constant 0 : index
      %c0_9 = arith.constant 0 : index
      %15 = vector.load %arg5[%c0_8, %c0_9] : memref<8x128xf32, #tpu.memory_space<vmem>>, vector<1x128xf32>
      %cst = arith.constant dense<0.000000e+00> : vector<128xf32>
      %16 = vector.multi_reduction <add>, %8, %cst [0] : vector<1x128xf32> to vector<128xf32>
      %17 = vector.shape_cast %16 : vector<128xf32> to vector<1x128xf32>
      %18 = arith.addf %15, %17 : vector<1x128xf32>
      %c0_10 = arith.constant 0 : index
      %c0_11 = arith.constant 0 : index
      %19 = vector.load %arg5[%c0_10, %c0_11] : memref<8x128xf32, #tpu.memory_space<vmem>>, vector<1x128xf32>
      tpu.vector_store %arg5[%c0_10, %c0_11], %18 {strides = array<i32>} : memref<8x128xf32, #tpu.memory_space<vmem>>, vector<1x128xf32>,
    } else {
    }
    %c0_i32_6 = arith.constant 0 : i32
    %12 = arith.cmpi eq, %arg1, %c0_i32_6 : i32
    %13 = arith.extui %12 : i1 to i32
    %c0_i32_7 = arith.constant 0 : i32
    %14 = arith.cmpi ne, %13, %c0_i32_7 : i32
    scf.if %14 {
      %c0_8 = arith.constant 0 : index
      %c0_9 = arith.constant 0 : index
      %15 = vector.load %arg5[%c0_8, %c0_9] : memref<8x128xf32, #tpu.memory_space<vmem>>, vector<8x128xf32>
      %16 = tpu.iota {dimensions = array<i32: 1>} : vector<8x128xi32>
      %c16_i32 = arith.constant 16 : i32
      %c0_i32_10 = arith.constant 0 : i32
      %17 = arith.cmpi eq, %c16_i32, %c0_i32_10 : i32
      %c1_i32_11 = arith.constant 1 : i32
      %18 = arith.select %17, %c1_i32_11, %c16_i32 : i32
      %19 = vector.broadcast %18 : i32 to vector<8x128xi32>
      %20 = arith.remsi %16, %19 : vector<8x128xi32>
      %c0_i32_12 = arith.constant 0 : i32
      %21 = vector.broadcast %c0_i32_12 : i32 to vector<8x128xi32>
      %22 = arith.cmpi ne, %20, %21 : vector<8x128xi32>
      %c0_i32_13 = arith.constant 0 : i32
      %23 = vector.broadcast %c0_i32_13 : i32 to vector<8x128xi32>
      %24 = arith.cmpi slt, %20, %23 : vector<8x128xi32>
      %c0_i32_14 = arith.constant 0 : i32
      %25 = arith.cmpi slt, %18, %c0_i32_14 : i32
      %26 = vector.broadcast %25 : i1 to vector<8x128xi1>
      %27 = vector.broadcast %26 : vector<8x128xi1> to vector<8x128xi1>
      %28 = arith.xori %24, %27 : vector<8x128xi1>
      %29 = arith.andi %28, %22 : vector<8x128xi1>
      %30 = vector.broadcast %18 : i32 to vector<8x128xi32>
      %31 = arith.addi %20, %30 : vector<8x128xi32>
      %32 = arith.select %29, %31, %20 : vector<8x128xi1>, vector<8x128xi32>
      %c0_i32_15 = arith.constant 0 : i32
      %33 = vector.broadcast %c0_i32_15 : i32 to vector<8x128xi32>
      %34 = arith.cmpi eq, %32, %33 : vector<8x128xi32>
      %c15_i32 = arith.constant 15 : i32
      %35 = vector.broadcast %c15_i32 : i32 to vector<8x128xi32>
      %36 = arith.cmpi eq, %32, %35 : vector<8x128xi32>
      %37 = arith.ori %34, %36 : vector<8x128xi1>
      %cst = arith.constant 5.000000e-01 : f32
      %cst_16 = arith.constant 1.000000e+00 : f32
      %38 = vector.broadcast %cst : f32 to vector<8x128xf32>
      %39 = vector.broadcast %cst_16 : f32 to vector<8x128xf32>
      %40 = arith.select %37, %38, %39 : vector<8x128xi1>, vector<8x128xf32>
      %41 = arith.mulf %15, %40 : vector<8x128xf32>
      %42 = vector.shape_cast %41 : vector<8x128xf32> to vector<1x8x128xf32>
      %cst_17 = arith.constant dense<0.000000e+00> : vector<1xf32>
      %43 = vector.multi_reduction <add>, %42, %cst_17 [1, 2] : vector<1x8x128xf32> to vector<1xf32>
      %44 = vector.shape_cast %43 : vector<1xf32> to vector<1x1x1xf32>
      %45 = vector.extract %44[0, 0, 0] : f32 from vector<1x1x1xf32>
      %cst_18 = arith.constant 0.00833333377 : f32
      %46 = arith.mulf %45, %cst_18 : f32
      %47 = vector.broadcast %46 : f32 to vector<1x8x128xf32>
      %c0_19 = arith.constant 0 : index
      %c0_20 = arith.constant 0 : index
      %c0_21 = arith.constant 0 : index
      %48 = vector.load %arg4[%c0_19, %c0_20, %c0_21] : memref<1x8x128xf32, #tpu.memory_space<vmem>>, vector<1x8x128xf32>
      tpu.vector_store %arg4[%c0_19, %c0_20, %c0_21], %47 {strides = array<i32>} : memref<1x8x128xf32, #tpu.memory_space<vmem>>, vector<1x8x128xf32>,
    } else {
    }
    return
  }
  func.func @transform_0(%arg0: i32, %arg1: i32) -> (i32, i32) {
    %c1_i32 = arith.constant 1 : i32
    %0 = arith.muli %arg0, %c1_i32 : i32
    %1 = arith.addi %0, %arg1 : i32
    %c0_i32 = arith.constant 0 : i32
    %2 = arith.minsi %1, %c0_i32 : i32
    %c0_i32_0 = arith.constant 0 : i32
    %c0_i32_1 = arith.constant 0 : i32
    return %2, %c0_i32_0 : i32, i32
  }
  func.func @transform_1(%arg0: i32, %arg1: i32) -> (i32, i32) {
    %c1_i32 = arith.constant 1 : i32
    %0 = arith.muli %arg0, %c1_i32 : i32
    %1 = arith.addi %0, %arg1 : i32
    %c0_i32 = arith.constant 0 : i32
    %2 = arith.minsi %1, %c0_i32 : i32
    %c0_i32_0 = arith.constant 0 : i32
    %c0_i32_1 = arith.constant 0 : i32
    return %2, %c0_i32_0 : i32, i32
  }
  func.func @transform_2(%arg0: i32, %arg1: i32) -> (i32, i32, i32) {
    %c0_i32 = arith.constant 0 : i32
    %c0_i32_0 = arith.constant 0 : i32
    %c0_i32_1 = arith.constant 0 : i32
    return %arg0, %c0_i32, %c0_i32_0 : i32, i32, i32
  }
}

</mosaic_0001>

<llo_original>
// kernel: tpu_custom_call.1
$region0: #{tpu_custom_call.1}
  #allocation0 [shape = 'u32[]', space=smem, size = 0x4, offset = 0x4, fixed_abs, tag = 'smem constant byte address 0x4 - core index']
  #allocation1 [shape = 'u32[144,128]{1,0:T(1,128)}', space=vmem, size = 0x12000, scoped, tag = 'internal scratch']
  #allocation2 [shape = 'f32[8,128]{1,0:T(8,128)}', space=vmem, size = 0x1000, scoped, tag = 'scratch operand']
  %s0 = inlined_call_operand.hbm [shape: f32[1,128], index: 0, kind: input, shape index: {}]
  %s1 = inlined_call_operand.vmem [shape: f32[1,128], index: 1, kind: input, shape index: {}]
  %s2 = inlined_call_operand.hbm [shape: f32[2,8,128], index: 2, kind: output, shape index: {}]
  %s3 = sld [smem:[#allocation0]]
  $region57: #{tpu_custom_call.1} parent=0
    _
  %s5 = ssub.s32 1, %s3
  %s6 = scalar_select 0, %s5, %s3
  $region1: #{tpu_custom_call.1} parent=0
    #allocation3 [shape = 'u8[1024]{0}', space=vmem, size = 0x400, scoped, tag = 'input window, operand 0']
    #allocation4 [shape = 's32[2]{0}', space=sflag, size = 0x8, scoped, tag = 'scoped memory for tpu_custom_call.1']
    #allocation5 [shape = 's32[2]{0}', space=sflag, size = 0x8, scoped, tag = 'scoped memory for tpu_custom_call.1']
    #allocation6 [shape = 'u8[8192]{0}', space=vmem, size = 0x2000, scoped, tag = 'output window, operand 0']
    %7 = vsyncpa [#allocation4], 0
    %s8 = scalar_lea.sflag [#allocation4], 1
    %9 = vsyncpa %s8, 0
    %10 = vsyncpa [#allocation5], 0
    %s11 = scalar_lea.sflag [#allocation5], 1
    %12 = vsyncpa %s11, 0
    loop: start=0, step=1, limit=4
    $region2: #{tpu_custom_call.1} parent=1 // loop_pre_header
      _
    $region3: #{tpu_custom_call.1} parent=1 // loop_header
      %s14 = sphi 0, %s18
      %p15 = scmp.ge.s32.totalorder %s14, 4
      %s21 = sphi 0, %s33
      %s22 = sphi 0, %s29
      %s23 = sphi 0, %s21
      %s24 = sphi 0, %s22
      %s25 = sphi 0, %s23
      %s26 = sphi 0, %s24
      %s42 = sphi 0, %s44
      %s45 = sphi 0, %s42
      %s46 = sphi 0, %s45
      %s62 = sphi 0, %s46
      %s74 = sphi 0, %s76
      %s77 = sphi 0, %s74
      %s78 = sphi 0, %s77
      %s94 = sphi 0, %s78
      %s100 = sphi 0, %s102
      %s103 = sphi 0, %s100
      %s104 = sphi 0, %s103
      %s120 = sphi 0, %s104
    $region4: #{tpu_custom_call.1} parent=1 // loop_header_branch
      %17 = sbr.rel (%p15) target = $region8
    $region5: #{tpu_custom_call.1} parent=1 // loop_body
      %s19 = ssub.s32 %s14, 1
      %s20 = ssub.s32 %s14, 2
      %s27 = sadd.s32 1, %s22
      %p28 = scmp.ge.s32.totalorder %s27, 1
      %s29 = scalar_select %p28, 0, %s27
      %s30 = sadd.s32 1, %s21
      %s31 = scalar_select %p28, %s30, %s21
      %p32 = scmp.ge.s32.totalorder %s31, 2
      %s33 = scalar_select %p32, 0, %s31
      %s34 = sadd.s32 %s21, %s22
      %p35 = scmp.lt.s32.totalorder %s34, 0
      %s36 = scalar_select %p35, %s34, 0
      %s37 = sadd.s32 %s33, %s29
      %p38 = scmp.lt.s32.totalorder %s37, 0
      %s39 = scalar_select %p38, %s37, 0
      %s40 = ssub.s32 %s36, %s39
      %p41 = scmp.eq.s32.totalorder %s40, 0
      %s43 = sadd.s32 %s42, 1
      %s44 = scalar_select %p41, %s42, %s43
      %p47 = pneg %p41
      %p48 = scmp.eq.s32.totalorder %s14, 1
      %p49 = por %p47, %p48
      %p50 = scmp.ne.s32.totalorder %s42, %s45
      %p51 = scmp.eq.s32.totalorder %s14, 0
      %p52 = por %p50, %p51
      %p53 = scmp.ne.s32.totalorder %s42, %s45
      %p54 = scmp.eq.s32.totalorder %s19, 1
      %p55 = por %p53, %p54
      %p56 = scmp.ne.s32.totalorder %s45, %s46
      %p57 = scmp.eq.s32.totalorder %s19, 0
      %p58 = por %p56, %p57
      %p59 = scmp.ne.s32.totalorder %s45, %s46
      %p60 = scmp.eq.s32.totalorder %s20, 1
      %p61 = por %p59, %p60
      %p63 = scmp.ne.s32.totalorder %s46, %s62
      %p64 = scmp.eq.s32.totalorder %s20, 0
      %p65 = por %p63, %p64
      %s66 = sadd.s32 %s21, %s22
      %p67 = scmp.lt.s32.totalorder %s66, 0
      %s68 = scalar_select %p67, %s66, 0
      %s69 = sadd.s32 %s33, %s29
      %p70 = scmp.lt.s32.totalorder %s69, 0
      %s71 = scalar_select %p70, %s69, 0
      %s72 = ssub.s32 %s68, %s71
      %p73 = scmp.eq.s32.totalorder %s72, 0
      %s75 = sadd.s32 %s74, 1
      %s76 = scalar_select %p73, %s74, %s75
      %p79 = pneg %p73
      %p80 = scmp.eq.s32.totalorder %s14, 1
      %p81 = por %p79, %p80
      %p82 = scmp.ne.s32.totalorder %s74, %s77
      %p83 = scmp.eq.s32.totalorder %s14, 0
      %p84 = por %p82, %p83
      %p85 = scmp.ne.s32.totalorder %s74, %s77
      %p86 = scmp.eq.s32.totalorder %s19, 1
      %p87 = por %p85, %p86
      %p88 = scmp.ne.s32.totalorder %s77, %s78
      %p89 = scmp.eq.s32.totalorder %s19, 0
      %p90 = por %p88, %p89
      %p91 = scmp.ne.s32.totalorder %s77, %s78
      %p92 = scmp.eq.s32.totalorder %s20, 1
      %p93 = por %p91, %p92
      %p95 = scmp.ne.s32.totalorder %s78, %s94
      %p96 = scmp.eq.s32.totalorder %s20, 0
      %p97 = por %p95, %p96
      %s98 = ssub.s32 %s21, %s33
      %p99 = scmp.eq.s32.totalorder %s98, 0
      %s101 = sadd.s32 %s100, 1
      %s102 = scalar_select %p99, %s100, %s101
      %p105 = pneg %p99
      %p106 = scmp.eq.s32.totalorder %s14, 1
      %p107 = por %p105, %p106
      %p108 = scmp.ne.s32.totalorder %s100, %s103
      %p109 = scmp.eq.s32.totalorder %s14, 0
      %p110 = por %p108, %p109
      %p111 = scmp.ne.s32.totalorder %s100, %s103
      %p112 = scmp.eq.s32.totalorder %s19, 1
      %p113 = por %p111, %p112
      %p114 = scmp.ne.s32.totalorder %s103, %s104
      %p115 = scmp.eq.s32.totalorder %s19, 0
      %p116 = por %p114, %p115
      %p117 = scmp.ne.s32.totalorder %s103, %s104
      %p118 = scmp.eq.s32.totalorder %s20, 1
      %p119 = por %p117, %p118
      %p121 = scmp.ne.s32.totalorder %s104, %s120
      %p122 = scmp.eq.s32.totalorder %s20, 0
      %p123 = por %p121, %p122
      %p124 = scmp.le.s32.totalorder 1, %s14
      %p125 = scmp.lt.s32.totalorder %s14, 3
      %p126 = pnand %p124, %p125
      %p127 = pneg %p126
      // Predicated region
      $region9: #{tpu_custom_call.1} parent=5 // pred_check
        _
      $region10: #{tpu_custom_call.1} parent=5 // pred_check_branch
        %129 = sbr.rel (%p126) target = $region12
      $region11: #{tpu_custom_call.1} parent=5 // pred_region
        %s130 = ssub.s32 %s14, 1
      $region12: #{tpu_custom_call.1} parent=5 // pred_fallthru
        _
      %p131 = scmp.lt.s32.totalorder %s14, 2
      // Predicated region
      $region13: #{tpu_custom_call.1} parent=5 // pred_check
        %p132 = pneg %p131
      $region14: #{tpu_custom_call.1} parent=5 // pred_check_branch
        %134 = sbr.rel (%p132) target = $region16
      $region15: #{tpu_custom_call.1} parent=5 // pred_region
        // Predicated region
        $region17: #{tpu_custom_call.1} parent=15 // pred_check
          %p135 = pneg %p52
        $region18: #{tpu_custom_call.1} parent=15 // pred_check_branch
          %137 = sbr.rel (%p135) target = $region20
        $region19: #{tpu_custom_call.1} parent=15 // pred_region
          %s138 = sand.u32 %s42, 1
          %s139 = scalar_lea.sflag [#allocation4], %s138
          %s140 = sand.u32 %s42, 1
          %s141 = scalar_lea.vmem [#allocation3], %s140
          %s142 = sadd.s32 %s21, %s22
          %p143 = scmp.lt.s32.totalorder %s142, 0
          %s144 = scalar_select %p143, %s142, 0
          %s146 = ssub.s32 16, 16
          %147 = vsyncadd %s139, %s146
          %s148 = smul.addr %s144, 16
          %s149 = scalar_lea.hbm %s0, %s148
          %s151 = sshll.u32 %s141, 4
          %s152 = int_to_ptr.vmem [resolvable:$true] %s151
          %154 = dma.hbm_to_vmem [thread:$0]  %s149, 16, %s152, %s139
        $region20: #{tpu_custom_call.1} parent=15 // pred_fallthru
          _
        // Predicated region
        $region21: #{tpu_custom_call.1} parent=15 // pred_check
          %p155 = pneg %p84
        $region22: #{tpu_custom_call.1} parent=15 // pred_check_branch
          %157 = sbr.rel (%p155) target = $region24
        $region23: #{tpu_custom_call.1} parent=15 // pred_region
          %s158 = sadd.s32 %s21, %s22
          %p159 = scmp.lt.s32.totalorder %s158, 0
          %s160 = scalar_select %p159, %s158, 0
          %p161 = scmp.lt.s32.totalorder %s160, 0
          %s162 = scalar_select %p161, %s160, 0
          %s163 = scalar_lea.vmem %s1, %s162
          %s164 = sadd.s32 %s21, %s22
          %p165 = scmp.lt.s32.totalorder %s164, 0
          %s166 = scalar_select %p165, %s164, 0
        $region24: #{tpu_custom_call.1} parent=15 // pred_fallthru
          _
      $region16: #{tpu_custom_call.1} parent=5 // pred_fallthru
        _
      %p167 = scmp.le.s32.totalorder 1, %s14
      %p168 = scmp.lt.s32.totalorder %s14, 3
      %p169 = pnand %p167, %p168
      %p170 = pneg %p169
      // Predicated region
      $region25: #{tpu_custom_call.1} parent=5 // pred_check
        _
      $region26: #{tpu_custom_call.1} parent=5 // pred_check_branch
        %172 = sbr.rel (%p169) target = $region28
      $region27: #{tpu_custom_call.1} parent=5 // pred_region
        %s173 = ssub.s32 %s14, 1
        %s174 = sand.u32 %s45, 1
        %s175 = scalar_lea.sflag [#allocation4], %s174
        %s176 = sand.u32 %s45, 1
        %s177 = scalar_lea.vmem [#allocation3], %s176
        // Predicated region
        $region29: #{tpu_custom_call.1} parent=27 // pred_check
          %p178 = pneg %p58
        $region30: #{tpu_custom_call.1} parent=27 // pred_check_branch
          %180 = sbr.rel (%p178) target = $region32
        $region31: #{tpu_custom_call.1} parent=27 // pred_region
          %181 = dma.done %s175, 16
        $region32: #{tpu_custom_call.1} parent=27 // pred_fallthru
          _
        %s182 = sand.u32 %s45, 1
        %s183 = scalar_lea.sflag [#allocation4], %s182
        %s184 = sand.u32 %s45, 1
        %s185 = scalar_lea.vmem [#allocation3], %s184
        %p186 = pneg %p58
        %p187 = pneg %p55
        %s188 = sadd.s32 %s23, %s24
        %p189 = scmp.lt.s32.totalorder %s188, 0
        %s190 = scalar_select %p189, %s188, 0
        %p191 = scmp.lt.s32.totalorder %s190, 0
        %s192 = scalar_select %p191, %s190, 0
        %s193 = scalar_lea.vmem %s1, %s192
        %p194 = pneg %p90
        %p195 = pneg %p87
        %p196 = pneg %p116
        %p197 = pneg %p113
        %s198 = sand.u32 %s103, 1
        %s199 = scalar_lea.sflag [#allocation5], %s198
        %s200 = sand.u32 %s103, 1
        %s201 = smul.addr %s200, 8
        %s202 = scalar_lea.vmem [#allocation6], %s201
        %s203 = sadd.s32 %s23, %s24
        %p204 = scmp.lt.s32.totalorder %s203, 0
        %s205 = scalar_select %p204, %s203, 0
        %s206 = sadd.s32 %s23, %s24
        %p207 = scmp.lt.s32.totalorder %s206, 0
        %s208 = scalar_select %p207, %s206, 0
        %p209 = scmp.lt.s32.totalorder %s208, 0
        %s210 = scalar_select %p209, %s208, 0
        %s211 = scalar_lea.vmem %s1, %s210
        %s212 = sadd.s32 %s23, %s24
        %p213 = scmp.lt.s32.totalorder %s212, 0
        %s214 = scalar_select %p213, %s212, 0
        %s215 = sadd.s32 %s23, %s24
        %p216 = scmp.eq.s32.totalorder %s24, 0
        // Predicated region
        $region33: #{tpu_custom_call.1} parent=27 // pred_check
          %p217 = pneg %p216
        $region34: #{tpu_custom_call.1} parent=27 // pred_check_branch
          %219 = sbr.rel (%p217) target = $region36
        $region35: #{tpu_custom_call.1} parent=27 // pred_region
          %220 = vst [vmem:[#allocation2] sm:$0xff] 0.0
        $region36: #{tpu_custom_call.1} parent=27 // pred_fallthru
          _
        %v221 = vld [vmem:[%s177] sm:$0x1]
        %v222 = vld [vmem:[%s211] sm:$0x1]
        %v223 = vsub.f32 %v221, %v222
        %v224 = vmul.f32 %v223, %v223
        %p225 = scmp.lt.s32.totalorder %s215, 1
        // Predicated region
        $region37: #{tpu_custom_call.1} parent=27 // pred_check
          %p226 = pneg %p225
        $region38: #{tpu_custom_call.1} parent=27 // pred_check_branch
          %228 = sbr.rel (%p226) target = $region40
        $region39: #{tpu_custom_call.1} parent=27 // pred_region
          %v229 = vld [vmem:[#allocation2] sm:$0x1]
          %v230 = vadd.f32 %v224, 0.0
          %v231 = vadd.f32 %v229, %v230
          %232 = vst [vmem:[#allocation2] sm:$0x1] %v231
        $region40: #{tpu_custom_call.1} parent=27 // pred_fallthru
          _
        // Predicated region
        $region41: #{tpu_custom_call.1} parent=27 // pred_check
          %p233 = pneg %p216
        $region42: #{tpu_custom_call.1} parent=27 // pred_check_branch
          %235 = sbr.rel (%p233) target = $region44
        $region43: #{tpu_custom_call.1} parent=27 // pred_region
          %v236 = vld [vmem:[#allocation2] sm:$0xff]
          %v237 = vlaneseq
          %v238 = vand.u32 %v237, 127
          %vm239 = vcmp.lt.s32.totalorder %v238, 0
          %v240 = vsub.s32 0, %v238
          %v241 = vsel %vm239, %v240, %v238
          %v242 = vshrl.u32 %v241, 4
          %v243 = vand.u32 %v241, 15
          %v244 = vsub.s32 0, %v243
          %v245 = vsel %vm239, %v244, %v243
          %vm246 = vcmp.ne.s32.totalorder %v245, 0
          %vm247 = vcmp.lt.s32.totalorder %v245, 0
          %vm248 = vmand %vm247, %vm246
          %v249 = vadd.s32 %v245, 16
          %v250 = vsel %vm248, %v249, %v245
          %vm251 = vcmp.eq.s32.totalorder %v250, 0
          %vm252 = vcmp.eq.s32.totalorder %v250, 15
          %vm253 = vmor %vm251, %vm252
          %v254 = vsel %vm253, 0.5, 1.0
          %v255 = vmul.f32 %v236, %v254
          %256 = vadd.xlane.f32.xlu0 %v255
          %v257 = vpop.xlane.xlu0 %256
          %v258 = vrot.slane %v257, 4
          %v259 = vadd.f32 %v257, %v258
          %v260 = vrot.slane %v259, 2
          %v261 = vadd.f32 %v259, %v260
          %v262 = vrot.slane %v261, 1
          %v263 = vadd.f32 %v261, %v262
          %s264 = vtos %v263
          %s265 = smul.f32 %s264, 0.008333334
          %v266 = vstv %s265
          %267 = vst [vmem:[%s202] sm:$0xff] %v266
        $region44: #{tpu_custom_call.1} parent=27 // pred_fallthru
          _
        %s268 = sand.u32 %s103, 1
        %s269 = scalar_lea.sflag [#allocation5], %s268
        %s270 = sand.u32 %s103, 1
        %s271 = smul.addr %s270, 8
        %s272 = scalar_lea.vmem [#allocation6], %s271
        // Predicated region
        $region45: #{tpu_custom_call.1} parent=27 // pred_check
          %p273 = pneg %p113
        $region46: #{tpu_custom_call.1} parent=27 // pred_check_branch
          %275 = sbr.rel (%p273) target = $region48
        $region47: #{tpu_custom_call.1} parent=27 // pred_region
          %s277 = ssub.s32 128, 128
          %278 = vsyncadd %s269, %s277
          %s279 = smul.addr %s23, 128
          %s280 = scalar_lea.hbm %s2, %s279
          %s282 = sshll.u32 %s272, 4
          %s283 = int_to_ptr.vmem [resolvable:$true] %s282
          %285 = dma.vmem_to_hbm [thread:$0]  %s283, 128, %s280, %s269
        $region48: #{tpu_custom_call.1} parent=27 // pred_fallthru
          _
      $region28: #{tpu_custom_call.1} parent=5 // pred_fallthru
        _
      %p286 = scmp.le.s32.totalorder 2, %s14
      // Predicated region
      $region49: #{tpu_custom_call.1} parent=5 // pred_check
        %p287 = pneg %p286
      $region50: #{tpu_custom_call.1} parent=5 // pred_check_branch
        %289 = sbr.rel (%p287) target = $region52
      $region51: #{tpu_custom_call.1} parent=5 // pred_region
        %s290 = ssub.s32 %s14, 2
        // Predicated region
        $region53: #{tpu_custom_call.1} parent=51 // pred_check
          %p291 = pneg %p119
        $region54: #{tpu_custom_call.1} parent=51 // pred_check_branch
          %293 = sbr.rel (%p291) target = $region56
        $region55: #{tpu_custom_call.1} parent=51 // pred_region
          %s294 = sand.u32 %s104, 1
          %s295 = scalar_lea.sflag [#allocation5], %s294
          %s296 = sand.u32 %s104, 1
          %s297 = smul.addr %s296, 8
          %s298 = scalar_lea.vmem [#allocation6], %s297
          %299 = dma.done %s295, 128
        $region56: #{tpu_custom_call.1} parent=51 // pred_fallthru
          _
      $region52: #{tpu_custom_call.1} parent=5 // pred_fallthru
        _
    $region6: #{tpu_custom_call.1} parent=1 // loop_footer
      %s18 = sadd.s32 1, %s14
    $region7: #{tpu_custom_call.1} parent=1 // loop_footer_branch
      %13 = sbr.rel target = $region3
    $region8: #{tpu_custom_call.1} parent=1 // loop_exit
      _
    %300 = vsyncpa [#allocation4], 1
    %s301 = scalar_lea.sflag [#allocation4], 1
    %302 = vsyncpa %s301, 1
    %303 = vsyncpa [#allocation5], 1
    %s304 = scalar_lea.sflag [#allocation5], 1
    %305 = vsyncpa %s304, 1

</llo_original>
